<compile_context>
chip_gen: v7x
topology: tpu7x:2x2x1
jax: 0.10.0
libtpu: 0.0.40
codegen_flags: <defaults>
</compile_context>

<pallas_src>
import jax
import jax.numpy as jnp
from jax.experimental import pallas as pl
from jax.experimental.pallas import tpu as pltpu


def _round_up(n, m):
    return ((n + m - 1) // m) * m


def _reparam_kernel(x_ref, w_ref, b_ref, eps_ref, out_ref):
    """x: (TB, H) [bf16], w: (H, 2*Zp) [bf16], b: (1, 2*Zp) [f32],
    eps: (TB, Zp) [f32], out: (TB, 3*Zp) [f32] = [mu | var | z]."""
    zp = w_ref.shape[1] // 2

    # Single fused matmul for both heads (f32 accumulation on the MXU).
    pre = jnp.dot(x_ref[...], w_ref[...],
                  preferred_element_type=jnp.float32) + b_ref[...]

    mu = pre[:, :zp]            # 128-aligned slice
    vpre = pre[:, zp:]

    # softplus matching F.softplus(beta=1, threshold=20), f32 math.
    var = jnp.where(vpre > 20.0, vpre,
                    jnp.log1p(jnp.exp(jnp.minimum(vpre, 20.0))))

    # z = mu + eps * sqrt(var + 1e-10)
    std = jnp.sqrt(var + 1e-10)
    z = mu + eps_ref[...] * std

    # Lane-dense, 128-aligned unmasked stores into a single output slab.
    out_ref[:, :zp] = mu.astype(out_ref.dtype)
    out_ref[:, zp:2 * zp] = var.astype(out_ref.dtype)
    out_ref[:, 2 * zp:] = z.astype(out_ref.dtype)


def reparameterize_trick(x, w_mu, b_mu, w_var, b_var, eps,
                         *, matmul_dtype=jnp.bfloat16):
    """x: (B, H); w_*: (H, Z); b_*: (1, Z) or (Z,); eps: (B, Z).

    Returns (mu, var, z), each (B, Z) float32."""
    B, H = x.shape
    Z = w_mu.shape[1]
    Zp = _round_up(Z, 128)          # lane-align the per-head output width

    # Pack both heads into one lane-aligned weight/bias slab.
    w_packed = jnp.zeros((H, 2 * Zp), jnp.float32)
    w_packed = w_packed.at[:, :Z].set(w_mu).at[:, Zp:Zp + Z].set(w_var)
    b_packed = jnp.zeros((1, 2 * Zp), jnp.float32)
    b_packed = (b_packed.at[:, :Z].set(b_mu.reshape(1, Z))
                        .at[:, Zp:Zp + Z].set(b_var.reshape(1, Z)))

    eps_p = jnp.zeros((B, Zp), jnp.float32).at[:, :Z].set(eps)

    # Batch tiling: largest tile up to 512 rows (tiny VMEM footprint either
    # way; fits v7x's 64 MiB with huge headroom), batch axis "parallel" so it
    # shards across TensorCores where available.
    TB = min(_round_up(B, 8), 512)
    Bp = _round_up(B, TB)
    x_p = x
    if Bp != B:
        x_p = jnp.pad(x_p, ((0, Bp - B), (0, 0)))
        eps_p = jnp.pad(eps_p, ((0, Bp - B), (0, 0)))

    # MXU operands in bf16 (f32 accumulation requested in-kernel).
    x_p = x_p.astype(matmul_dtype)
    w_packed = w_packed.astype(matmul_dtype)

    out = pl.pallas_call(
        _reparam_kernel,
        out_shape=jax.ShapeDtypeStruct((Bp, 3 * Zp), jnp.float32),
        grid_spec=pltpu.PrefetchScalarGridSpec(
            num_scalar_prefetch=0,
            grid=(Bp // TB,),
            in_specs=[
                pl.BlockSpec((TB, H), lambda i: (i, 0)),        # x tile
                pl.BlockSpec((H, 2 * Zp), lambda i: (0, 0)),    # weights (resident)
                pl.BlockSpec((1, 2 * Zp), lambda i: (0, 0)),    # biases (resident)
                pl.BlockSpec((TB, Zp), lambda i: (i, 0)),       # eps tile
            ],
            out_specs=pl.BlockSpec((TB, 3 * Zp), lambda i: (i, 0)),
        ),
        compiler_params=pltpu.CompilerParams(
            dimension_semantics=("parallel",),
        ),
    )(x_p, w_packed, b_packed, eps_p)

    mu = out[:B, :Z]
    var = out[:B, Zp:Zp + Z]
    z = out[:B, 2 * Zp:2 * Zp + Z]
    return mu, var, z


def init_params(key, h_dim, z_dim):
    """PyTorch nn.Linear-style init (uniform in +/- 1/sqrt(fan_in)),
    deterministic via the given key. Weights stored transposed as (H, Z)."""
    k1, k2, k3, k4 = jax.random.split(key, 4)
    bound = 1.0 / jnp.sqrt(h_dim)
    w_mu = jax.random.uniform(k1, (h_dim, z_dim), jnp.float32, -bound, bound)
    b_mu = jax.random.uniform(k2, (1, z_dim), jnp.float32, -bound, bound)
    w_var = jax.random.uniform(k3, (h_dim, z_dim), jnp.float32, -bound, bound)
    b_var = jax.random.uniform(k4, (1, z_dim), jnp.float32, -bound, bound)
    return w_mu, b_mu, w_var, b_var


if __name__ == "__main__":
    B, H_DIM, Z_DIM = 8, 32, 16

    key = jax.random.PRNGKey(0)
    k_x, k_params, k_eps = jax.random.split(key, 3)

    x = jax.random.normal(k_x, (B, H_DIM), jnp.float32)
    w_mu, b_mu, w_var, b_var = init_params(k_params, H_DIM, Z_DIM)
    eps = jax.random.normal(k_eps, (B, Z_DIM), jnp.float32)

    mu, var, z = reparameterize_trick(x, w_mu, b_mu, w_var, b_var, eps)
    jax.block_until_ready((mu, var, z))

    # Reference 1: same bf16 matmul operands, f32 accumulation (tight check).
    xb = x.astype(jnp.bfloat16)
    mu_ref = jnp.dot(xb, w_mu.astype(jnp.bfloat16),
                     preferred_element_type=jnp.float32) + b_mu
    var_ref = jax.nn.softplus(
        jnp.dot(xb, w_var.astype(jnp.bfloat16),
                preferred_element_type=jnp.float32) + b_var)
    z_ref = mu_ref + eps * jnp.sqrt(var_ref + 1e-10)
    assert jnp.allclose(mu, mu_ref, atol=1e-4, rtol=1e-4)
    assert jnp.allclose(var, var_ref, atol=1e-4, rtol=1e-4)
    assert jnp.allclose(z, z_ref, atol=1e-4, rtol=1e-4)

    # Reference 2: full-f32 reference (loose check — bf16 MXU operands).
    mu_f32 = x @ w_mu + b_mu
    var_f32 = jax.nn.softplus(x @ w_var + b_var)
    z_f32 = mu_f32 + eps * jnp.sqrt(var_f32 + 1e-10)
    assert jnp.allclose(mu, mu_f32, atol=1e-1, rtol=1e-1)
    assert jnp.allclose(var, var_f32, atol=1e-1, rtol=1e-1)
    assert jnp.allclose(z, z_f32, atol=1e-1, rtol=1e-1)

    print("KERNEL_OK")
</pallas_src>

<mosaic_0001>
module attributes {stable_mosaic.version = 11 : i64} {
  func.func @_reparam_kernel(%arg0: i32, %arg1: memref<8x32xbf16, #tpu.memory_space<vmem>>, %arg2: memref<32x256xbf16, #tpu.memory_space<vmem>>, %arg3: memref<1x256xf32, #tpu.memory_space<vmem>>, %arg4: memref<8x128xf32, #tpu.memory_space<vmem>>, %arg5: memref<8x384xf32, #tpu.memory_space<vmem>>) attributes {dimension_semantics = [#tpu.dimension_semantics<parallel>], iteration_bounds = array<i64: 1>, scalar_prefetch = 0 : i64, scratch_operands = 0 : i64, tpu.core_type = #tpu.core_type<tc>, window_params = [{transform_indices = @transform_0, window_bounds = array<i64: 8, 32>}, {pipeline_mode = #tpu.pipeline_mode<synchronous>, transform_indices = @transform_1, window_bounds = array<i64: 32, 256>}, {pipeline_mode = #tpu.pipeline_mode<synchronous>, transform_indices = @transform_2, window_bounds = array<i64: 1, 256>}, {transform_indices = @transform_3, window_bounds = array<i64: 8, 128>}, {transform_indices = @transform_4, window_bounds = array<i64: 8, 384>}]} {
    %c0 = arith.constant 0 : index
    %c0_0 = arith.constant 0 : index
    %0 = vector.load %arg1[%c0, %c0_0] : memref<8x32xbf16, #tpu.memory_space<vmem>>, vector<8x32xbf16>
    %c0_1 = arith.constant 0 : index
    %c0_2 = arith.constant 0 : index
    %1 = vector.load %arg2[%c0_1, %c0_2] : memref<32x256xbf16, #tpu.memory_space<vmem>>, vector<32x256xbf16>
    %cst = arith.constant dense<0.000000e+00> : vector<8x256xf32>
    %2 = tpu.matmul %0, %1, %cst {dimension_numbers = #tpu.dot_dimension_numbers<[1], [0], [0], [1], [0, 0, 1, 1], [], []>} : vector<8x32xbf16>, vector<32x256xbf16>, vector<8x256xf32> -> vector<8x256xf32>
    %c0_3 = arith.constant 0 : index
    %c0_4 = arith.constant 0 : index
    %3 = vector.load %arg3[%c0_3, %c0_4] : memref<1x256xf32, #tpu.memory_space<vmem>>, vector<1x256xf32>
    %4 = vector.broadcast %3 : vector<1x256xf32> to vector<8x256xf32>
    %5 = arith.addf %2, %4 : vector<8x256xf32>
    %6 = vector.extract_strided_slice %5 {offsets = [0, 0], sizes = [8, 128], strides = [1, 1]} : vector<8x256xf32> to vector<8x128xf32>
    %7 = vector.extract_strided_slice %5 {offsets = [0, 128], sizes = [8, 128], strides = [1, 1]} : vector<8x256xf32> to vector<8x128xf32>
    %cst_5 = arith.constant 2.000000e+01 : f32
    %8 = vector.broadcast %cst_5 : f32 to vector<8x128xf32>
    %9 = arith.cmpf ogt, %7, %8 : vector<8x128xf32>
    %cst_6 = arith.constant 2.000000e+01 : f32
    %10 = vector.broadcast %cst_6 : f32 to vector<8x128xf32>
    %11 = arith.minimumf %7, %10 : vector<8x128xf32>
    %12 = math.exp %11 : vector<8x128xf32>
    %13 = math.log1p %12 : vector<8x128xf32>
    %14 = arith.select %9, %7, %13 : vector<8x128xi1>, vector<8x128xf32>
    %cst_7 = arith.constant 1.000000e-10 : f32
    %15 = vector.broadcast %cst_7 : f32 to vector<8x128xf32>
    %16 = arith.addf %14, %15 : vector<8x128xf32>
    %17 = math.sqrt %16 : vector<8x128xf32>
    %c0_8 = arith.constant 0 : index
    %c0_9 = arith.constant 0 : index
    %18 = vector.load %arg4[%c0_8, %c0_9] : memref<8x128xf32, #tpu.memory_space<vmem>>, vector<8x128xf32>
    %19 = arith.mulf %18, %17 : vector<8x128xf32>
    %20 = arith.addf %6, %19 : vector<8x128xf32>
    %c0_10 = arith.constant 0 : index
    %c0_11 = arith.constant 0 : index
    %21 = vector.load %arg5[%c0_10, %c0_11] : memref<8x384xf32, #tpu.memory_space<vmem>>, vector<8x128xf32>
    tpu.vector_store %arg5[%c0_10, %c0_11], %6 {strides = array<i32>} : memref<8x384xf32, #tpu.memory_space<vmem>>, vector<8x128xf32>,
    %c0_12 = arith.constant 0 : index
    %c128 = arith.constant 128 : index
    %22 = vector.load %arg5[%c0_12, %c128] : memref<8x384xf32, #tpu.memory_space<vmem>>, vector<8x128xf32>
    tpu.vector_store %arg5[%c0_12, %c128], %14 {strides = array<i32>} : memref<8x384xf32, #tpu.memory_space<vmem>>, vector<8x128xf32>,
    %c0_13 = arith.constant 0 : index
    %c256 = arith.constant 256 : index
    %23 = vector.load %arg5[%c0_13, %c256] : memref<8x384xf32, #tpu.memory_space<vmem>>, vector<8x128xf32>
    tpu.vector_store %arg5[%c0_13, %c256], %20 {strides = array<i32>} : memref<8x384xf32, #tpu.memory_space<vmem>>, vector<8x128xf32>,
    return
  }
  func.func @transform_0(%arg0: i32) -> (i32, i32) {
    %c0_i32 = arith.constant 0 : i32
    %c0_i32_0 = arith.constant 0 : i32
    return %arg0, %c0_i32 : i32, i32
  }
  func.func @transform_1(%arg0: i32) -> (i32, i32) {
    %c0_i32 = arith.constant 0 : i32
    %c0_i32_0 = arith.constant 0 : i32
    %c0_i32_1 = arith.constant 0 : i32
    return %c0_i32, %c0_i32_0 : i32, i32
  }
  func.func @transform_2(%arg0: i32) -> (i32, i32) {
    %c0_i32 = arith.constant 0 : i32
    %c0_i32_0 = arith.constant 0 : i32
    %c0_i32_1 = arith.constant 0 : i32
    return %c0_i32, %c0_i32_0 : i32, i32
  }
  func.func @transform_3(%arg0: i32) -> (i32, i32) {
    %c0_i32 = arith.constant 0 : i32
    %c0_i32_0 = arith.constant 0 : i32
    return %arg0, %c0_i32 : i32, i32
  }
  func.func @transform_4(%arg0: i32) -> (i32, i32) {
    %c0_i32 = arith.constant 0 : i32
    %c0_i32_0 = arith.constant 0 : i32
    return %arg0, %c0_i32 : i32, i32
  }
}

</mosaic_0001>

<llo_original>
// kernel: tpu_custom_call.1
$region0: #{tpu_custom_call.1}
  #allocation0 [shape = 'u32[]', space=smem, size = 0x4, offset = 0x4, fixed_abs, tag = 'smem constant byte address 0x4 - core index']
  #allocation1 [shape = 'u32[144,128]{1,0:T(1,128)}', space=vmem, size = 0x12000, scoped, tag = 'internal scratch']
  %s0 = inlined_call_operand.hbm [shape: bf16[8,32], index: 0, kind: input, shape index: {}]
  %s1 = inlined_call_operand.hbm [shape: bf16[32,256], index: 1, kind: input, shape index: {}]
  %s2 = inlined_call_operand.vmem [shape: f32[1,256], index: 2, kind: input, shape index: {}]
  %s3 = inlined_call_operand.vmem [shape: f32[8,128], index: 3, kind: input, shape index: {}]
  %s4 = inlined_call_operand.hbm [shape: f32[8,384], index: 4, kind: output, shape index: {}]
  %s5 = sld [smem:[#allocation0]]
  $region34: #{tpu_custom_call.1} parent=0
    _
  %s7 = ssub.s32 1, %s5
  %s8 = scalar_select 0, %s7, %s5
  $region1: #{tpu_custom_call.1} parent=0
    #allocation2 [shape = 'u8[2048]{0}', space=vmem, size = 0x800, scoped, tag = 'input window, operand 0, single buffered']
    #allocation3 [shape = 's32[1]{0}', space=sflag, size = 0x4, scoped, tag = 'scoped memory for tpu_custom_call.1']
    #allocation4 [shape = 's32[1]{0}', space=sflag, size = 0x4, scoped, tag = 'scoped memory for tpu_custom_call.1']
    #allocation5 [shape = 'u8[16384]{0}', space=vmem, size = 0x4000, scoped, tag = 'input window, operand 1, single buffered']
    #allocation6 [shape = 's32[1]{0}', space=sflag, size = 0x4, scoped, tag = 'scoped memory for tpu_custom_call.1']
    #allocation7 [shape = 'u8[12288]{0}', space=vmem, size = 0x3000, scoped, tag = 'output window, operand 0, single buffered']
    %9 = vsyncpa [#allocation3], 0
    %10 = vsyncpa [#allocation6], 0
    %11 = vsyncpa [#allocation4], 0
    // Predicated region
    $region2: #{tpu_custom_call.1} parent=1 // pred_check
      _
    $region3: #{tpu_custom_call.1} parent=1 // pred_check_branch
      %13 = sbr.rel (0) target = $region5
    $region4: #{tpu_custom_call.1} parent=1 // pred_region
      %s15 = ssub.s32 64, 64
      %16 = vsyncadd [#allocation3], %s15
      %s18 = sshll.u32 [#allocation2], 4
      %s19 = int_to_ptr.vmem [resolvable:$true] %s18
      %21 = dma.hbm_to_vmem [thread:$0]  %s0, 64, %s19, [#allocation3]
    $region5: #{tpu_custom_call.1} parent=1 // pred_fallthru
      _
    // Predicated region
    $region6: #{tpu_custom_call.1} parent=1 // pred_check
      _
    $region7: #{tpu_custom_call.1} parent=1 // pred_check_branch
      %23 = sbr.rel (0) target = $region9
    $region8: #{tpu_custom_call.1} parent=1 // pred_region
      %s25 = ssub.s32 512, 512
      %26 = vsyncadd [#allocation6], %s25
      %s27 = sshll.u32 [#allocation5], 4
      %s28 = int_to_ptr.vmem [resolvable:$true] %s27
      %33 = dma.hbm_to_vmem [thread:$0]  %s1, 512, %s28, [#allocation6], 128, 128, 8
    $region9: #{tpu_custom_call.1} parent=1 // pred_fallthru
      _
    // Predicated region
    $region10: #{tpu_custom_call.1} parent=1 // pred_check
      _
    $region11: #{tpu_custom_call.1} parent=1 // pred_check_branch
      %35 = sbr.rel (0) target = $region13
    $region12: #{tpu_custom_call.1} parent=1 // pred_region
      _
    $region13: #{tpu_custom_call.1} parent=1 // pred_fallthru
      _
    // Predicated region
    $region14: #{tpu_custom_call.1} parent=1 // pred_check
      _
    $region15: #{tpu_custom_call.1} parent=1 // pred_check_branch
      %37 = sbr.rel (0) target = $region17
    $region16: #{tpu_custom_call.1} parent=1 // pred_region
      _
    $region17: #{tpu_custom_call.1} parent=1 // pred_fallthru
      _
    // Predicated region
    $region18: #{tpu_custom_call.1} parent=1 // pred_check
      _
    $region19: #{tpu_custom_call.1} parent=1 // pred_check_branch
      %39 = sbr.rel (0) target = $region21
    $region20: #{tpu_custom_call.1} parent=1 // pred_region
      %40 = dma.done [#allocation3], 64
    $region21: #{tpu_custom_call.1} parent=1 // pred_fallthru
      _
    // Predicated region
    $region22: #{tpu_custom_call.1} parent=1 // pred_check
      _
    $region23: #{tpu_custom_call.1} parent=1 // pred_check_branch
      %42 = sbr.rel (0) target = $region25
    $region24: #{tpu_custom_call.1} parent=1 // pred_region
      %43 = dma.done [#allocation6], 512
    $region25: #{tpu_custom_call.1} parent=1 // pred_fallthru
      _
    %v45 = vld [vmem:[#allocation2] sm:$0xf]
    %v46 = vld [vmem:[#allocation5] sm:$0xff]
    %v47 = vld [vmem:[#allocation5 + $0x8] sm:$0xff]
    %v48 = vld [vmem:[#allocation5 + $0x10] sm:$0xff]
    %v49 = vld [vmem:[#allocation5 + $0x18] sm:$0xff]
    %v50 = vld [vmem:[%s2] sm:$0x3]
    %v52 = vlaneseq
    %v53 = vshrl.u32 %v52, 7
    %v54 = vsub.s32 0, %v53
    %v55 = vrot.slane %v50, %v54
    %v56 = vlaneseq
    %v57 = vshrl.u32 %v56, 7
    %v58 = vsub.s32 1, %v57
    %v59 = vrot.slane %v50, %v58
    %v66 = vunpack.c.l.b16 %v46
    %v67 = vunpack.c.h.b16 %v46
    %v68 = vunpack.c.l.b16 %v47
    %v69 = vunpack.c.h.b16 %v47
    %v70 = vunpack.c.l.b16 %v48
    %v71 = vunpack.c.h.b16 %v48
    %v72 = vunpack.c.l.b16 %v49
    %v73 = vunpack.c.h.b16 %v49
    %v74 = vpack.c.b16 %v68, %v66
    %v75 = vpack.c.b16 %v69, %v67
    %v76 = vpack.c.b16 %v72, %v70
    %v77 = vpack.c.b16 %v73, %v71
    %vm82 = vcmask 261120
    %v84 = vsel %vm82, %v45, 0
    %86 = vmatprep.subr.bf16.mxu0 %v75
    %87 = vmatpush1.bf16.msra.mxu0 %v74
    %88 = vmatprep.subr.bf16.mxu0 %v77
    %89 = vmatpush1.bf16.msra.mxu0 %v76
    %90 = vmatprep.subr.bf16.mxu0 0
    %91 = vmatpush1.bf16.msra.mxu0 0
    %92 = vmatprep.subr.bf16.mxu0 0
    %93 = vmatpush1.bf16.msra.mxu0 0
    %94 = vmatprep.subr.bf16.mxu0 0
    %95 = vmatpush1.bf16.msra.mxu0 0
    %96 = vmatprep.subr.bf16.mxu0 0
    %97 = vmatpush1.bf16.msra.mxu0 0
    %98 = vmatprep.subr.bf16.mxu0 0
    %99 = vmatpush1.bf16.msra.mxu0 0
    %100 = vmatprep.subr.bf16.mxu0 0
    %101 = vmatpush1.bf16.msra.mxu0 0
    %102 = vmatprep.subr.bf16.mxu0 0
    %103 = vmatpush1.bf16.msra.mxu0 0
    %104 = vmatprep.subr.bf16.mxu0 0
    %105 = vmatpush1.bf16.msra.mxu0 0
    %106 = vmatprep.subr.bf16.mxu0 0
    %107 = vmatpush1.bf16.msra.mxu0 0
    %108 = vmatprep.subr.bf16.mxu0 0
    %109 = vmatpush1.bf16.msra.mxu0 0
    %110 = vmatprep.subr.bf16.mxu0 0
    %111 = vmatpush1.bf16.msra.mxu0 0
    %112 = vmatprep.subr.bf16.mxu0 0
    %113 = vmatpush1.bf16.msra.mxu0 0
    %114 = vmatprep.subr.bf16.mxu0 0
    %115 = vmatpush1.bf16.msra.mxu0 0
    %116 = vmatprep.subr.bf16.mxu0 0
    %117 = vmatpush1.bf16.msra.mxu0 0
    %118 = vmatprep.mubr.bf16.mxu0 0
    %119 = vmatmul.mubr.bf16.gmra.mrb[0].mxu0 %v84
    %v120 = vpop.f32.mrb[0].mxu0
    %v121 = vadd.f32 %v55, %v120
    %v122 = vpop.f32.mrb[0].mxu0
    %v123 = vadd.f32 %v59, %v122
    %v124 = vpop.f32.mrb[0].mxu0
    %v125 = vpop.f32.mrb[0].mxu0
    %126 = vdwg.mxu0
    %vm127 = vcmp.gt.f32.partialorder %v123, 20.0
    %v128 = vmin.f32 %v123, 20.0
    %v129 = vmul.f32 %v128, 1.442695
    %v130 = vpow.pop %v129
    %v131 = vadd.f32 %v130, 1.0
    %v132 = vlog2.pop %v131
    %v133 = vmul.f32 %v132, 0.6931472
    %v134 = vmul.f32 -0.5, %v130
    %v135 = vadd.f32 %v134, 1.0
    %v136 = vmul.f32 %v135, %v130
    %v137 = vand.u32 2147483647, %v130
    %vm138 = vcmp.lt.f32.partialorder %v137, 0.0004427343
    %v139 = vsel %vm138, %v136, %v133
    %v140 = vsel %vm127, %v123, %v139
    %v141 = vadd.f32 %v140, 1e-10
    %v142 = vrsqrt.pop %v141
    %v143 = vmul.f32 %v141, %v142
    %vm144 = vcmp.eq.f32.partialorder %v141, inf
    %v145 = vsel %vm144, %v141, %v143
    %vm146 = vcmp.eq.f32.partialorder %v141, 0.0
    %v147 = vand.u32 %v141, 2147483648
    %v148 = vsel %vm146, %v147, %v145
    %v149 = vld [vmem:[%s3] sm:$0xff]
    %v150 = vmul.f32 %v149, %v148
    %v151 = vadd.f32 %v121, %v150
    %152 = vst [vmem:[#allocation7] sm:$0xff] %v121
    %153 = vst [vmem:[#allocation7 + $0x8] sm:$0xff] %v140
    %154 = vst [vmem:[#allocation7 + $0x10] sm:$0xff] %v151
    // Predicated region
    $region26: #{tpu_custom_call.1} parent=1 // pred_check
      _
    $region27: #{tpu_custom_call.1} parent=1 // pred_check_branch
      %156 = sbr.rel (0) target = $region29
    $region28: #{tpu_custom_call.1} parent=1 // pred_region
      %s158 = ssub.s32 384, 384
      %159 = vsyncadd [#allocation4], %s158
      %s161 = sshll.u32 [#allocation7], 4
      %s162 = int_to_ptr.vmem [resolvable:$true] %s161
      %164 = dma.vmem_to_hbm [thread:$0]  %s162, 384, %s4, [#allocation4]
    $region29: #{tpu_custom_call.1} parent=1 // pred_fallthru
      _
    // Predicated region
    $region30: #{tpu_custom_call.1} parent=1 // pred_check
      _
    $region31: #{tpu_custom_call.1} parent=1 // pred_check_branch
      %166 = sbr.rel (0) target = $region33
    $region32: #{tpu_custom_call.1} parent=1 // pred_region
      %167 = dma.done [#allocation4], 384
    $region33: #{tpu_custom_call.1} parent=1 // pred_fallthru
      _
    %168 = vsyncpa [#allocation3], 1
    %169 = vsyncpa [#allocation6], 1
    %170 = vsyncpa [#allocation4], 1

</llo_original>
